<compile_context>
chip_gen: v7x
topology: tpu7x:2x2x1
jax: 0.10.0
libtpu: 0.0.40
codegen_flags: <defaults>
</compile_context>

<pallas_src>
import jax
import jax.numpy as jnp
from jax.experimental import pallas as pl
from jax.experimental.pallas import tpu as pltpu

_VMEM_LIMIT_BYTES = 48 * 1024 * 1024      # > v5e 16 MiB scoped default, < v7x 64 MiB/TC
_WEIGHT_BLOCK_BUDGET = 8 * 1024 * 1024    # per-buffer budget for the (K, tile_n) weight slab
_MN_BLOCK_BUDGET = 24 * 1024 * 1024       # budget for double-buffered x + out tiles
_MAX_TILE_M = 1024
_SMALL_PROBLEM_MACS = 1 << 20             # below this, plain jnp.dot beats kernel overhead


def _round_up(x, m):
    return ((x + m - 1) // m) * m


def _linear_kernel(x_ref, wt_ref, b_ref, o_ref):
    # x_ref: (tile_m, K), wt_ref: (K, tile_n) pre-transposed weight,
    # b_ref: (1, tile_n), o_ref: (tile_m, tile_n).  f32 MXU accumulation.
    o_ref[...] = (
        jnp.dot(x_ref[...], wt_ref[...], preferred_element_type=jnp.float32)
        + b_ref[...]
    ).astype(o_ref.dtype)


def _invariant_spec(block_shape, index_map, single_buffer):
    """BlockSpec for a grid-invariant operand; request 1 buffer if supported."""
    if single_buffer:
        try:
            return pl.BlockSpec(block_shape, index_map,
                                pipeline_mode=pl.Buffered(1))
        except (AttributeError, TypeError):
            pass  # older JAX without pipeline_mode / Buffered
    return pl.BlockSpec(block_shape, index_map)


def _pallas_linear(x2d, w1, b1, *, compute_dtype, single_buffer_weights):
    m, k = x2d.shape
    n = w1.shape[0]
    x_item = jnp.dtype(compute_dtype).itemsize
    w_item = x_item

    # ---- N layout: lane-dense padding only when it pays off -----------------
    if n % 128 == 0 or n < 128:
        n_pad = n            # full-dim last axis; masked stores beat 32x pad for tiny N
    else:
        n_pad = _round_up(n, 128)

    tile_n = n_pad
    if k * tile_n * w_item > _WEIGHT_BLOCK_BUDGET:
        # Tile N (256-lane multiples keep the 256x256 v6e/v7x MXU full) so the
        # resident weight slab fits v7x's 64 MiB/TC VMEM.
        tile_n = 256
        while (k * tile_n * 2 * w_item <= _WEIGHT_BLOCK_BUDGET
               and tile_n * 2 < n_pad):
            tile_n *= 2
        n_pad = _round_up(n, tile_n)
    num_n = n_pad // tile_n
    # TODO(synk): a K-reduction grid axis (+ f32 VMEM accumulator) would be
    # needed for very large in_size; not required at this module's sizes.

    # ---- M tiling: biggest tile that fits the budget, but keep >= 2 tiles ----
    per_row_bytes = 2 * (k * x_item + tile_n * 4)   # double-buffered x + out tiles
    fit = max(8, (_MN_BLOCK_BUDGET // per_row_bytes) // 8 * 8)
    two_tiles = max(8, _round_up((m + 1) // 2, 8))  # >=2 M tiles for v7x megacore
    tile_m = min(_MAX_TILE_M, fit, two_tiles)
    m_pad = _round_up(m, tile_m)
    num_m = m_pad // tile_m

    # ---- Operands: only M padded for x; weight/bias padded once (small) ------
    x_c = x2d.astype(compute_dtype)
    x_p = x_c if m_pad == m else (
        jnp.zeros((m_pad, k), compute_dtype).at[:m].set(x_c))

    wt = w1.T.astype(compute_dtype)                 # (K, N): transpose hoisted here
    b = b1.astype(jnp.float32).reshape(1, n)
    if n_pad != n:
        wt = jnp.zeros((k, n_pad), compute_dtype).at[:, :n].set(wt)
        b = jnp.zeros((1, n_pad), jnp.float32).at[:, :n].set(b)

    invariant = num_n == 1                          # weight/bias never change
    w_spec = _invariant_spec((k, tile_n), lambda j, i: (0, j),
                             single_buffer_weights and invariant)
    b_spec = _invariant_spec((1, tile_n), lambda j, i: (0, j),
                             single_buffer_weights and invariant)

    out_p = pl.pallas_call(
        _linear_kernel,
        out_shape=jax.ShapeDtypeStruct((m_pad, n_pad), jnp.float32),
        grid_spec=pltpu.PrefetchScalarGridSpec(
            num_scalar_prefetch=0,
            grid=(num_n, num_m),                    # N outer: weight reused over M tiles
            in_specs=[
                pl.BlockSpec((tile_m, k), lambda j, i: (i, 0)),   # x tile (true K)
                w_spec,                                            # W1^T slab
                b_spec,                                            # bias
            ],
            out_specs=pl.BlockSpec((tile_m, tile_n), lambda j, i: (i, j)),
        ),
        compiler_params=pltpu.CompilerParams(
            dimension_semantics=("parallel", "parallel"),  # no carried state
            vmem_limit_bytes=_VMEM_LIMIT_BYTES,
        ),
    )(x_p, wt, b)

    if m_pad != m or n_pad != n:
        out_p = out_p[:m, :n]
    return out_p


def basic_residual_nn_forward(x, params, *, use_pallas=None,
                              compute_dtype=jnp.float32):
    """Forward of BasicResidualNN: out = fc1(x).

    `params["w1"]` uses PyTorch nn.Linear layout (out_features, in_features);
    `params["b1"]` has shape (out_features,).  fc2 / ReLU are constructed in
    the module but never used in its forward, so they are intentionally not
    applied here.  compute_dtype=jnp.bfloat16 gives MXU-native throughput with
    f32 accumulation (slightly looser numerics than f32 inputs).
    """
    w1 = params["w1"]
    b1 = params["b1"]
    in_size = x.shape[-1]
    out_size = w1.shape[0]
    lead = x.shape[:-1]
    x2d = x.reshape(-1, in_size)
    m = x2d.shape[0]

    if use_pallas is None:
        # Tiny problems: fixed pallas_call overhead dominates; use fused XLA dot.
        use_pallas = (m * in_size * out_size) >= _SMALL_PROBLEM_MACS

    if not use_pallas:
        out2d = (x2d.astype(jnp.float32) @ w1.T.astype(jnp.float32)
                 + b1.astype(jnp.float32))
    else:
        try:
            out2d = _pallas_linear(x2d, w1, b1, compute_dtype=compute_dtype,
                                   single_buffer_weights=True)
        except Exception:
            # e.g. pl.Buffered(1) not supported by this JAX/Mosaic version:
            # retry with default double-buffered weight/bias blocks.
            out2d = _pallas_linear(x2d, w1, b1, compute_dtype=compute_dtype,
                                   single_buffer_weights=False)
    return out2d.reshape(lead + (out_size,))


def _reference_forward(x, params):
    """Pure-JAX reference mirroring the PyTorch forward (fc1 only)."""
    return x @ params["w1"].T + params["b1"]


def _init_linear(key, out_features, in_features):
    # Deterministic nn.Linear-style init: U(-1/sqrt(fan_in), 1/sqrt(fan_in)).
    kw, kb = jax.random.split(key)
    bound = 1.0 / jnp.sqrt(jnp.float32(in_features))
    w = jax.random.uniform(kw, (out_features, in_features), jnp.float32,
                           -bound, bound)
    b = jax.random.uniform(kb, (out_features,), jnp.float32, -bound, bound)
    return w, b


if __name__ == "__main__":
    # Small shapes consistent with the module's forward: x (..., input_size).
    seq_len, batch, input_size, output_size = 8, 2, 32, 4

    key = jax.random.PRNGKey(0)
    k_x, k_fc1, k_fc2 = jax.random.split(key, 3)

    x = jax.random.normal(k_x, (seq_len, batch, input_size), jnp.float32)
    w1, b1 = _init_linear(k_fc1, output_size, input_size)
    # fc2 exists in the module but is never used in forward; kept for parity.
    w2, b2 = _init_linear(k_fc2, output_size, output_size)
    params = dict(w1=w1, b1=b1, w2=w2, b2=b2)

    ref_out = _reference_forward(x, params)

    # Pallas kernel path (forced: at this toy size the auto path uses jnp.dot).
    out = basic_residual_nn_forward(x, params, use_pallas=True)
    out = jax.block_until_ready(out)
    assert out.shape == (seq_len, batch, output_size)
    assert jnp.allclose(out, ref_out, atol=1e-5, rtol=1e-5)

    # bf16-input MXU path (f32 accumulation) — looser tolerance for bf16 inputs.
    out_bf16 = basic_residual_nn_forward(x, params, use_pallas=True,
                                         compute_dtype=jnp.bfloat16)
    out_bf16 = jax.block_until_ready(out_bf16)
    assert jnp.allclose(out_bf16, ref_out, atol=5e-2, rtol=5e-2)

    # Auto-dispatch path (tiny problem -> plain jnp.dot fallback).
    out_auto = jax.block_until_ready(basic_residual_nn_forward(x, params))
    assert jnp.allclose(out_auto, ref_out, atol=1e-5, rtol=1e-5)

    print("KERNEL_OK")
</pallas_src>

<mosaic_0001>
module attributes {stable_mosaic.version = 11 : i64} {
  func.func @_linear_kernel(%arg0: i32, %arg1: i32, %arg2: memref<8x32xf32, #tpu.memory_space<vmem>>, %arg3: memref<32x4xf32, #tpu.memory_space<vmem>>, %arg4: memref<1x4xf32, #tpu.memory_space<vmem>>, %arg5: memref<8x4xf32, #tpu.memory_space<vmem>>) attributes {dimension_semantics = [#tpu.dimension_semantics<parallel>, #tpu.dimension_semantics<parallel>], iteration_bounds = array<i64: 1, 2>, scalar_prefetch = 0 : i64, scratch_operands = 0 : i64, tpu.core_type = #tpu.core_type<tc>, window_params = [{transform_indices = @transform_0, window_bounds = array<i64: 8, 32>}, {pipeline_mode = #tpu.pipeline_mode<synchronous>, transform_indices = @transform_1, window_bounds = array<i64: 32, 4>}, {pipeline_mode = #tpu.pipeline_mode<synchronous>, transform_indices = @transform_2, window_bounds = array<i64: 1, 4>}, {transform_indices = @transform_3, window_bounds = array<i64: 8, 4>}]} {
    %c0 = arith.constant 0 : index
    %c0_0 = arith.constant 0 : index
    %0 = vector.load %arg2[%c0, %c0_0] : memref<8x32xf32, #tpu.memory_space<vmem>>, vector<8x32xf32>
    %c0_1 = arith.constant 0 : index
    %c0_2 = arith.constant 0 : index
    %1 = vector.load %arg3[%c0_1, %c0_2] : memref<32x4xf32, #tpu.memory_space<vmem>>, vector<32x4xf32>
    %cst = arith.constant dense<0.000000e+00> : vector<8x4xf32>
    %2 = tpu.matmul %0, %1, %cst {dimension_numbers = #tpu.dot_dimension_numbers<[1], [0], [0], [1], [0, 0, 1, 1], [], []>} : vector<8x32xf32>, vector<32x4xf32>, vector<8x4xf32> -> vector<8x4xf32>
    %c0_3 = arith.constant 0 : index
    %c0_4 = arith.constant 0 : index
    %3 = vector.load %arg4[%c0_3, %c0_4] : memref<1x4xf32, #tpu.memory_space<vmem>>, vector<1x4xf32>
    %4 = vector.broadcast %3 : vector<1x4xf32> to vector<8x4xf32>
    %5 = arith.addf %2, %4 : vector<8x4xf32>
    %c0_5 = arith.constant 0 : index
    %c0_6 = arith.constant 0 : index
    %6 = vector.load %arg5[%c0_5, %c0_6] : memref<8x4xf32, #tpu.memory_space<vmem>>, vector<8x4xf32>
    tpu.vector_store %arg5[%c0_5, %c0_6], %5 {strides = array<i32>} : memref<8x4xf32, #tpu.memory_space<vmem>>, vector<8x4xf32>,
    return
  }
  func.func @transform_0(%arg0: i32, %arg1: i32) -> (i32, i32) {
    %c0_i32 = arith.constant 0 : i32
    %c0_i32_0 = arith.constant 0 : i32
    return %arg1, %c0_i32 : i32, i32
  }
  func.func @transform_1(%arg0: i32, %arg1: i32) -> (i32, i32) {
    %c0_i32 = arith.constant 0 : i32
    %c0_i32_0 = arith.constant 0 : i32
    return %c0_i32, %arg0 : i32, i32
  }
  func.func @transform_2(%arg0: i32, %arg1: i32) -> (i32, i32) {
    %c0_i32 = arith.constant 0 : i32
    %c0_i32_0 = arith.constant 0 : i32
    return %c0_i32, %arg0 : i32, i32
  }
  func.func @transform_3(%arg0: i32, %arg1: i32) -> (i32, i32) {
    %c0_i32 = arith.constant 0 : i32
    return %arg1, %arg0 : i32, i32
  }
}

module attributes {stable_mosaic.version = 11 : i64} {
  func.func @_linear_kernel(%arg0: i32, %arg1: i32, %arg2: memref<8x32xf32, #tpu.memory_space<vmem>>, %arg3: memref<32x4xf32, #tpu.memory_space<vmem>>, %arg4: memref<1x4xf32, #tpu.memory_space<vmem>>, %arg5: memref<8x4xf32, #tpu.memory_space<vmem>>) attributes {dimension_semantics = [#tpu.dimension_semantics<parallel>, #tpu.dimension_semantics<parallel>], iteration_bounds = array<i64: 1, 2>, scalar_prefetch = 0 : i64, scratch_operands = 0 : i64, tpu.core_type = #tpu.core_type<tc>, window_params = [{transform_indices = @transform_0, window_bounds = array<i64: 8, 32>}, {transform_indices = @transform_1, window_bounds = array<i64: 32, 4>}, {transform_indices = @transform_2, window_bounds = array<i64: 1, 4>}, {transform_indices = @transform_3, window_bounds = array<i64: 8, 4>}]} {
    %c0 = arith.constant 0 : index
    %c0_0 = arith.constant 0 : index
    %0 = vector.load %arg2[%c0, %c0_0] : memref<8x32xf32, #tpu.memory_space<vmem>>, vector<8x32xf32>
    %c0_1 = arith.constant 0 : index
    %c0_2 = arith.constant 0 : index
    %1 = vector.load %arg3[%c0_1, %c0_2] : memref<32x4xf32, #tpu.memory_space<vmem>>, vector<32x4xf32>
    %cst = arith.constant dense<0.000000e+00> : vector<8x4xf32>
    %2 = tpu.matmul %0, %1, %cst {dimension_numbers = #tpu.dot_dimension_numbers<[1], [0], [0], [1], [0, 0, 1, 1], [], []>} : vector<8x32xf32>, vector<32x4xf32>, vector<8x4xf32> -> vector<8x4xf32>
    %c0_3 = arith.constant 0 : index
    %c0_4 = arith.constant 0 : index
    %3 = vector.load %arg4[%c0_3, %c0_4] : memref<1x4xf32, #tpu.memory_space<vmem>>, vector<1x4xf32>
    %4 = vector.broadcast %3 : vector<1x4xf32> to vector<8x4xf32>
    %5 = arith.addf %2, %4 : vector<8x4xf32>
    %c0_5 = arith.constant 0 : index
    %c0_6 = arith.constant 0 : index
    %6 = vector.load %arg5[%c0_5, %c0_6] : memref<8x4xf32, #tpu.memory_space<vmem>>, vector<8x4xf32>
    tpu.vector_store %arg5[%c0_5, %c0_6], %5 {strides = array<i32>} : memref<8x4xf32, #tpu.memory_space<vmem>>, vector<8x4xf32>,
    return
  }
  func.func @transform_0(%arg0: i32, %arg1: i32) -> (i32, i32) {
    %c0_i32 = arith.constant 0 : i32
    %c0_i32_0 = arith.constant 0 : i32
    return %arg1, %c0_i32 : i32, i32
  }
  func.func @transform_1(%arg0: i32, %arg1: i32) -> (i32, i32) {
    %c0_i32 = arith.constant 0 : i32
    %c0_i32_0 = arith.constant 0 : i32
    return %c0_i32, %arg0 : i32, i32
  }
  func.func @transform_2(%arg0: i32, %arg1: i32) -> (i32, i32) {
    %c0_i32 = arith.constant 0 : i32
    %c0_i32_0 = arith.constant 0 : i32
    return %c0_i32, %arg0 : i32, i32
  }
  func.func @transform_3(%arg0: i32, %arg1: i32) -> (i32, i32) {
    %c0_i32 = arith.constant 0 : i32
    return %arg1, %arg0 : i32, i32
  }
}

</mosaic_0001>

<llo_original>
// kernel: tpu_custom_call.1
$region0: #{tpu_custom_call.1}
  #allocation0 [shape = 'u32[]', space=smem, size = 0x4, offset = 0x4, fixed_abs, tag = 'smem constant byte address 0x4 - core index']
  #allocation1 [shape = 'u32[144,128]{1,0:T(1,128)}', space=vmem, size = 0x12000, scoped, tag = 'internal scratch']
  %s0 = inlined_call_operand.vmem [shape: f32[16,32], index: 0, kind: input, shape index: {}]
  %s1 = inlined_call_operand.vmem [shape: f32[32,4], index: 1, kind: input, shape index: {}]
  %s2 = inlined_call_operand.vmem [shape: f32[1,4], index: 2, kind: input, shape index: {}]
  %s3 = inlined_call_operand.vmem [shape: f32[16,4], index: 3, kind: output, shape index: {}]
  %s4 = sld [smem:[#allocation0]]
  $region45: #{tpu_custom_call.1} parent=0
    _
  %s6 = ssub.s32 1, %s4
  %s7 = scalar_select 0, %s6, %s4
  loop: start=0, step=1, limit=4
  $region2: #{tpu_custom_call.1} parent=0 // loop_pre_header
    _
  $region3: #{tpu_custom_call.1} parent=0 // loop_header
    %s9 = sphi 0, %s13
    %p10 = scmp.ge.s32.totalorder %s9, 4
    %s16 = sphi 0, %s28
    %s17 = sphi 0, %s24
    %s18 = sphi 0, %s16
    %s19 = sphi 0, %s17
    %s20 = sphi 0, %s18
    %s21 = sphi 0, %s19
    %s31 = sphi 0, %s33
    %s34 = sphi 0, %s31
    %s35 = sphi 0, %s34
    %s51 = sphi 0, %s35
    %s57 = sphi 0, %s59
    %s60 = sphi 0, %s57
    %s61 = sphi 0, %s60
    %s77 = sphi 0, %s61
    %s83 = sphi 0, %s85
    %s86 = sphi 0, %s83
    %s87 = sphi 0, %s86
    %s103 = sphi 0, %s87
    %s111 = sphi 0, %s113
    %s114 = sphi 0, %s111
    %s115 = sphi 0, %s114
    %s131 = sphi 0, %s115
  $region4: #{tpu_custom_call.1} parent=0 // loop_header_branch
    %12 = sbr.rel (%p10) target = $region8
  $region5: #{tpu_custom_call.1} parent=0 // loop_body
    %s14 = ssub.s32 %s9, 1
    %s15 = ssub.s32 %s9, 2
    %s22 = sadd.s32 1, %s17
    %p23 = scmp.ge.s32.totalorder %s22, 2
    %s24 = scalar_select %p23, 0, %s22
    %s25 = sadd.s32 1, %s16
    %s26 = scalar_select %p23, %s25, %s16
    %p27 = scmp.ge.s32.totalorder %s26, 1
    %s28 = scalar_select %p27, 0, %s26
    %s29 = ssub.s32 %s17, %s24
    %p30 = scmp.eq.s32.totalorder %s29, 0
    %s32 = sadd.s32 %s31, 1
    %s33 = scalar_select %p30, %s31, %s32
    %p36 = pneg %p30
    %p37 = scmp.eq.s32.totalorder %s9, 1
    %p38 = por %p36, %p37
    %p39 = scmp.ne.s32.totalorder %s31, %s34
    %p40 = scmp.eq.s32.totalorder %s9, 0
    %p41 = por %p39, %p40
    %p42 = scmp.ne.s32.totalorder %s31, %s34
    %p43 = scmp.eq.s32.totalorder %s14, 1
    %p44 = por %p42, %p43
    %p45 = scmp.ne.s32.totalorder %s34, %s35
    %p46 = scmp.eq.s32.totalorder %s14, 0
    %p47 = por %p45, %p46
    %p48 = scmp.ne.s32.totalorder %s34, %s35
    %p49 = scmp.eq.s32.totalorder %s15, 1
    %p50 = por %p48, %p49
    %p52 = scmp.ne.s32.totalorder %s35, %s51
    %p53 = scmp.eq.s32.totalorder %s15, 0
    %p54 = por %p52, %p53
    %s55 = ssub.s32 %s16, %s28
    %p56 = scmp.eq.s32.totalorder %s55, 0
    %s58 = sadd.s32 %s57, 1
    %s59 = scalar_select %p56, %s57, %s58
    %p62 = pneg %p56
    %p63 = scmp.eq.s32.totalorder %s9, 1
    %p64 = por %p62, %p63
    %p65 = scmp.ne.s32.totalorder %s57, %s60
    %p66 = scmp.eq.s32.totalorder %s9, 0
    %p67 = por %p65, %p66
    %p68 = scmp.ne.s32.totalorder %s57, %s60
    %p69 = scmp.eq.s32.totalorder %s14, 1
    %p70 = por %p68, %p69
    %p71 = scmp.ne.s32.totalorder %s60, %s61
    %p72 = scmp.eq.s32.totalorder %s14, 0
    %p73 = por %p71, %p72
    %p74 = scmp.ne.s32.totalorder %s60, %s61
    %p75 = scmp.eq.s32.totalorder %s15, 1
    %p76 = por %p74, %p75
    %p78 = scmp.ne.s32.totalorder %s61, %s77
    %p79 = scmp.eq.s32.totalorder %s15, 0
    %p80 = por %p78, %p79
    %s81 = ssub.s32 %s16, %s28
    %p82 = scmp.eq.s32.totalorder %s81, 0
    %s84 = sadd.s32 %s83, 1
    %s85 = scalar_select %p82, %s83, %s84
    %p88 = pneg %p82
    %p89 = scmp.eq.s32.totalorder %s9, 1
    %p90 = por %p88, %p89
    %p91 = scmp.ne.s32.totalorder %s83, %s86
    %p92 = scmp.eq.s32.totalorder %s9, 0
    %p93 = por %p91, %p92
    %p94 = scmp.ne.s32.totalorder %s83, %s86
    %p95 = scmp.eq.s32.totalorder %s14, 1
    %p96 = por %p94, %p95
    %p97 = scmp.ne.s32.totalorder %s86, %s87
    %p98 = scmp.eq.s32.totalorder %s14, 0
    %p99 = por %p97, %p98
    %p100 = scmp.ne.s32.totalorder %s86, %s87
    %p101 = scmp.eq.s32.totalorder %s15, 1
    %p102 = por %p100, %p101
    %p104 = scmp.ne.s32.totalorder %s87, %s103
    %p105 = scmp.eq.s32.totalorder %s15, 0
    %p106 = por %p104, %p105
    %s107 = ssub.s32 %s17, %s24
    %s108 = ssub.s32 %s16, %s28
    %s109 = sor.u32 %s107, %s108
    %p110 = scmp.eq.s32.totalorder %s109, 0
    %s112 = sadd.s32 %s111, 1
    %s113 = scalar_select %p110, %s111, %s112
    %p116 = pneg %p110
    %p117 = scmp.eq.s32.totalorder %s9, 1
    %p118 = por %p116, %p117
    %p119 = scmp.ne.s32.totalorder %s111, %s114
    %p120 = scmp.eq.s32.totalorder %s9, 0
    %p121 = por %p119, %p120
    %p122 = scmp.ne.s32.totalorder %s111, %s114
    %p123 = scmp.eq.s32.totalorder %s14, 1
    %p124 = por %p122, %p123
    %p125 = scmp.ne.s32.totalorder %s114, %s115
    %p126 = scmp.eq.s32.totalorder %s14, 0
    %p127 = por %p125, %p126
    %p128 = scmp.ne.s32.totalorder %s114, %s115
    %p129 = scmp.eq.s32.totalorder %s15, 1
    %p130 = por %p128, %p129
    %p132 = scmp.ne.s32.totalorder %s115, %s131
    %p133 = scmp.eq.s32.totalorder %s15, 0
    %p134 = por %p132, %p133
    %p135 = scmp.le.s32.totalorder 1, %s9
    %p136 = scmp.lt.s32.totalorder %s9, 3
    %p137 = pnand %p135, %p136
    %p138 = pneg %p137
    // Predicated region
    $region9: #{tpu_custom_call.1} parent=5 // pred_check
      _
    $region10: #{tpu_custom_call.1} parent=5 // pred_check_branch
      %140 = sbr.rel (%p137) target = $region12
    $region11: #{tpu_custom_call.1} parent=5 // pred_region
      %s141 = ssub.s32 %s9, 1
      // Predicated region
      $region13: #{tpu_custom_call.1} parent=11 // pred_check
        %p142 = pneg %p73
      $region14: #{tpu_custom_call.1} parent=11 // pred_check_branch
        %144 = sbr.rel (%p142) target = $region16
      $region15: #{tpu_custom_call.1} parent=11 // pred_region
        %p145 = scmp.lt.s32.totalorder %s18, 0
        %s146 = scalar_select %p145, %s18, 0
        %s147 = smul.addr %s146, 8
        %s148 = scalar_lea.vmem %s1, %s147
      $region16: #{tpu_custom_call.1} parent=11 // pred_fallthru
        _
      // Predicated region
      $region17: #{tpu_custom_call.1} parent=11 // pred_check
        %p149 = pneg %p99
      $region18: #{tpu_custom_call.1} parent=11 // pred_check_branch
        %151 = sbr.rel (%p149) target = $region20
      $region19: #{tpu_custom_call.1} parent=11 // pred_region
        %p152 = scmp.lt.s32.totalorder %s18, 0
        %s153 = scalar_select %p152, %s18, 0
        %s154 = scalar_lea.vmem %s2, %s153
      $region20: #{tpu_custom_call.1} parent=11 // pred_fallthru
        _
    $region12: #{tpu_custom_call.1} parent=5 // pred_fallthru
      _
    %p155 = scmp.lt.s32.totalorder %s9, 2
    // Predicated region
    $region21: #{tpu_custom_call.1} parent=5 // pred_check
      %p156 = pneg %p155
    $region22: #{tpu_custom_call.1} parent=5 // pred_check_branch
      %158 = sbr.rel (%p156) target = $region24
    $region23: #{tpu_custom_call.1} parent=5 // pred_region
      // Predicated region
      $region25: #{tpu_custom_call.1} parent=23 // pred_check
        %p159 = pneg %p41
      $region26: #{tpu_custom_call.1} parent=23 // pred_check_branch
        %161 = sbr.rel (%p159) target = $region28
      $region27: #{tpu_custom_call.1} parent=23 // pred_region
        %p162 = scmp.lt.s32.totalorder %s17, 1
        %s163 = scalar_select %p162, %s17, 1
        %s164 = smul.addr %s163, 8
        %s165 = scalar_lea.vmem %s0, %s164
      $region28: #{tpu_custom_call.1} parent=23 // pred_fallthru
        _
    $region24: #{tpu_custom_call.1} parent=5 // pred_fallthru
      _
    %p166 = scmp.le.s32.totalorder 1, %s9
    %p167 = scmp.lt.s32.totalorder %s9, 3
    %p168 = pnand %p166, %p167
    %p169 = pneg %p168
    // Predicated region
    $region29: #{tpu_custom_call.1} parent=5 // pred_check
      _
    $region30: #{tpu_custom_call.1} parent=5 // pred_check_branch
      %171 = sbr.rel (%p168) target = $region32
    $region31: #{tpu_custom_call.1} parent=5 // pred_region
      %s172 = ssub.s32 %s9, 1
      %p173 = scmp.lt.s32.totalorder %s19, 1
      %s174 = scalar_select %p173, %s19, 1
      %s175 = smul.addr %s174, 8
      %s176 = scalar_lea.vmem %s0, %s175
      %p177 = pneg %p47
      %p178 = pneg %p44
      %p179 = scmp.lt.s32.totalorder %s18, 0
      %s180 = scalar_select %p179, %s18, 0
      %s181 = smul.addr %s180, 8
      %s182 = scalar_lea.vmem %s1, %s181
      %p183 = pneg %p73
      %p184 = pneg %p70
      %p185 = scmp.lt.s32.totalorder %s18, 0
      %s186 = scalar_select %p185, %s18, 0
      %s187 = scalar_lea.vmem %s2, %s186
      %p188 = pneg %p99
      %p189 = pneg %p96
      %p190 = pneg %p127
      %p191 = pneg %p124
      %p192 = scmp.lt.s32.totalorder %s19, 1
      %s193 = scalar_select %p192, %s19, 1
      %p194 = scmp.lt.s32.totalorder %s18, 0
      %s195 = scalar_select %p194, %s18, 0
      %s196 = sadd.s32 %s195, %s193
      %s197 = smul.addr %s196, 8
      %s198 = scalar_lea.vmem %s3, %s197
      %p199 = scmp.lt.s32.totalorder %s19, 1
      %s200 = scalar_select %p199, %s19, 1
      %s201 = smul.addr %s200, 8
      %s202 = scalar_lea.vmem %s0, %s201
      %p203 = scmp.lt.s32.totalorder %s18, 0
      %s204 = scalar_select %p203, %s18, 0
      %s205 = smul.addr %s204, 8
      %s206 = scalar_lea.vmem %s1, %s205
      %p207 = scmp.lt.s32.totalorder %s18, 0
      %s208 = scalar_select %p207, %s18, 0
      %s209 = scalar_lea.vmem %s2, %s208
      %p210 = scmp.lt.s32.totalorder %s19, 1
      %s211 = scalar_select %p210, %s19, 1
      %p212 = scmp.lt.s32.totalorder %s18, 0
      %s213 = scalar_select %p212, %s18, 0
      %s214 = sadd.s32 %s213, %s211
      %s215 = smul.addr %s214, 8
      %s216 = scalar_lea.vmem %s3, %s215
      %v217 = vld [vmem:[%s202] sm:$0xff]
      %v218 = vld [vmem:[%s206] sm:$0xff]
      %v219 = vld [vmem:[%s206 + $0x8] sm:$0xff]
      %v220 = vld [vmem:[%s206 + $0x10] sm:$0xff]
      %v221 = vld [vmem:[%s206 + $0x18] sm:$0xff]
      %v222 = vld [vmem:[%s209] sm:$0x1]
      %v224 = vlaneseq
      %v225 = vshrl.u32 %v224, 7
      %v226 = vsub.s32 0, %v225
      %v227 = vrot.slane %v222, %v226
      %vm229 = vcmask 261120
      %v231 = vsel %vm229, %v217, 0
      %233 = vmatprep.subr.mxu0 0.0
      %234 = vmatpush1.msra.mxu0 %v218
      %235 = vmatprep.subr.mxu0 0.0
      %236 = vmatpush1.msra.mxu0 %v219
      %237 = vmatprep.subr.mxu0 0.0
      %238 = vmatpush1.msra.mxu0 %v220
      %239 = vmatprep.subr.mxu0 0.0
      %240 = vmatpush1.msra.mxu0 %v221
      %241 = vmatprep.subr.mxu0 0.0
      %242 = vmatpush1.msra.mxu0 0.0
      %243 = vmatprep.subr.mxu0 0.0
      %244 = vmatpush1.msra.mxu0 0.0
      %245 = vmatprep.subr.mxu0 0.0
      %246 = vmatpush1.msra.mxu0 0.0
      %247 = vmatprep.subr.mxu0 0.0
      %248 = vmatpush1.msra.mxu0 0.0
      %249 = vmatprep.subr.mxu0 0.0
      %250 = vmatpush1.msra.mxu0 0.0
      %251 = vmatprep.subr.mxu0 0.0
      %252 = vmatpush1.msra.mxu0 0.0
      %253 = vmatprep.subr.mxu0 0.0
      %254 = vmatpush1.msra.mxu0 0.0
      %255 = vmatprep.subr.mxu0 0.0
      %256 = vmatpush1.msra.mxu0 0.0
      %257 = vmatprep.subr.mxu0 0.0
      %258 = vmatpush1.msra.mxu0 0.0
      %259 = vmatprep.subr.mxu0 0.0
      %260 = vmatpush1.msra.mxu0 0.0
      %261 = vmatprep.subr.mxu0 0.0
      %262 = vmatpush1.msra.mxu0 0.0
      %263 = vmatprep.subr.mxu0 0.0
      %264 = vmatpush1.msra.mxu0 0.0
      %265 = vmatprep.subr.mxu0 0.0
      %266 = vmatpush1.msra.mxu0 0.0
      %267 = vmatprep.subr.mxu0 0.0
      %268 = vmatpush1.msra.mxu0 0.0
      %269 = vmatprep.subr.mxu0 0.0
      %270 = vmatpush1.msra.mxu0 0.0
      %271 = vmatprep.subr.mxu0 0.0
      %272 = vmatpush1.msra.mxu0 0.0
      %273 = vmatprep.subr.mxu0 0.0
      %274 = vmatpush1.msra.mxu0 0.0
      %275 = vmatprep.subr.mxu0 0.0
      %276 = vmatpush1.msra.mxu0 0.0
      %277 = vmatprep.subr.mxu0 0.0
      %278 = vmatpush1.msra.mxu0 0.0
      %279 = vmatprep.subr.mxu0 0.0
      %280 = vmatpush1.msra.mxu0 0.0
      %281 = vmatprep.subr.mxu0 0.0
      %282 = vmatpush1.msra.mxu0 0.0
      %283 = vmatprep.subr.mxu0 0.0
      %284 = vmatpush1.msra.mxu0 0.0
      %285 = vmatprep.subr.mxu0 0.0
      %286 = vmatpush1.msra.mxu0 0.0
      %287 = vmatprep.subr.mxu0 0.0
      %288 = vmatpush1.msra.mxu0 0.0
      %289 = vmatprep.subr.mxu0 0.0
      %290 = vmatpush1.msra.mxu0 0.0
      %291 = vmatprep.subr.mxu0 0.0
      %292 = vmatpush1.msra.mxu0 0.0
      %293 = vmatprep.subr.mxu0 0.0
      %294 = vmatpush1.msra.mxu0 0.0
      %295 = vmatprep.subr.mxu0 0.0
      %296 = vmatpush1.msra.mxu0 0.0
      %297 = vmatprep.mubr.f32.mxu0 0.0
      %298 = vmatmul.mubr.f32.gmra.mrb[0].mxu0 %v231
      %v299 = vpop.f32.mrb[0].mxu0
      %v300 = vadd.f32 %v227, %v299
      %v301 = vpop.f32.mrb[0].mxu0
      %302 = vdwg.mxu0
      %vm303 = vcmask 31744
      %304 = vst.msk [vmem:[%s216] sm:$0xff] %vm303, %v300
      %p305 = scmp.lt.s32.totalorder %s19, 1
      %s306 = scalar_select %p305, %s19, 1
      %p307 = scmp.lt.s32.totalorder %s18, 0
      %s308 = scalar_select %p307, %s18, 0
      %s309 = sadd.s32 %s308, %s306
      %s310 = smul.addr %s309, 8
      %s311 = scalar_lea.vmem %s3, %s310
      // Predicated region
      $region33: #{tpu_custom_call.1} parent=31 // pred_check
        %p312 = pneg %p124
      $region34: #{tpu_custom_call.1} parent=31 // pred_check_branch
        %314 = sbr.rel (%p312) target = $region36
      $region35: #{tpu_custom_call.1} parent=31 // pred_region
        _
      $region36: #{tpu_custom_call.1} parent=31 // pred_fallthru
        _
    $region32: #{tpu_custom_call.1} parent=5 // pred_fallthru
      _
    %p315 = scmp.le.s32.totalorder 2, %s9
    // Predicated region
    $region37: #{tpu_custom_call.1} parent=5 // pred_check
      %p316 = pneg %p315
    $region38: #{tpu_custom_call.1} parent=5 // pred_check_branch
      %318 = sbr.rel (%p316) target = $region40
    $region39: #{tpu_custom_call.1} parent=5 // pred_region
      %s319 = ssub.s32 %s9, 2
      // Predicated region
      $region41: #{tpu_custom_call.1} parent=39 // pred_check
        %p320 = pneg %p130
      $region42: #{tpu_custom_call.1} parent=39 // pred_check_branch
        %322 = sbr.rel (%p320) target = $region44
      $region43: #{tpu_custom_call.1} parent=39 // pred_region
        %p323 = scmp.lt.s32.totalorder %s21, 1
        %s324 = scalar_select %p323, %s21, 1
        %p325 = scmp.lt.s32.totalorder %s20, 0
        %s326 = scalar_select %p325, %s20, 0
        %s327 = sadd.s32 %s326, %s324
        %s328 = smul.addr %s327, 8
        %s329 = scalar_lea.vmem %s3, %s328
      $region44: #{tpu_custom_call.1} parent=39 // pred_fallthru
        _
    $region40: #{tpu_custom_call.1} parent=5 // pred_fallthru
      _
  $region6: #{tpu_custom_call.1} parent=0 // loop_footer
    %s13 = sadd.s32 1, %s9
  $region7: #{tpu_custom_call.1} parent=0 // loop_footer_branch
    %8 = sbr.rel target = $region3
  $region8: #{tpu_custom_call.1} parent=0 // loop_exit
    _

// kernel: tpu_custom_call.1
$region0: #{tpu_custom_call.1}
  #allocation0 [shape = 'u32[]', space=smem, size = 0x4, offset = 0x4, fixed_abs, tag = 'smem constant byte address 0x4 - core index']
  #allocation1 [shape = 'u32[144,128]{1,0:T(1,128)}', space=vmem, size = 0x12000, scoped, tag = 'internal scratch']
  %s0 = inlined_call_operand.vmem [shape: f32[16,32], index: 0, kind: input, shape index: {}]
  %s1 = inlined_call_operand.vmem [shape: f32[32,4], index: 1, kind: input, shape index: {}]
  %s2 = inlined_call_operand.vmem [shape: f32[1,4], index: 2, kind: input, shape index: {}]
  %s3 = inlined_call_operand.vmem [shape: f32[16,4], index: 3, kind: output, shape index: {}]
  %s4 = sld [smem:[#allocation0]]
  $region45: #{tpu_custom_call.1} parent=0
    _
  %s6 = ssub.s32 1, %s4
  %s7 = scalar_select 0, %s6, %s4
  loop: start=0, step=1, limit=4
  $region2: #{tpu_custom_call.1} parent=0 // loop_pre_header
    _
  $region3: #{tpu_custom_call.1} parent=0 // loop_header
    %s9 = sphi 0, %s13
    %p10 = scmp.ge.s32.totalorder %s9, 4
    %s16 = sphi 0, %s28
    %s17 = sphi 0, %s24
    %s18 = sphi 0, %s16
    %s19 = sphi 0, %s17
    %s20 = sphi 0, %s18
    %s21 = sphi 0, %s19
    %s31 = sphi 0, %s33
    %s34 = sphi 0, %s31
    %s35 = sphi 0, %s34
    %s51 = sphi 0, %s35
    %s57 = sphi 0, %s59
    %s60 = sphi 0, %s57
    %s61 = sphi 0, %s60
    %s77 = sphi 0, %s61
    %s83 = sphi 0, %s85
    %s86 = sphi 0, %s83
    %s87 = sphi 0, %s86
    %s103 = sphi 0, %s87
    %s111 = sphi 0, %s113
    %s114 = sphi 0, %s111
    %s115 = sphi 0, %s114
    %s131 = sphi 0, %s115
  $region4: #{tpu_custom_call.1} parent=0 // loop_header_branch
    %12 = sbr.rel (%p10) target = $region8
  $region5: #{tpu_custom_call.1} parent=0 // loop_body
    %s14 = ssub.s32 %s9, 1
    %s15 = ssub.s32 %s9, 2
    %s22 = sadd.s32 1, %s17
    %p23 = scmp.ge.s32.totalorder %s22, 2
    %s24 = scalar_select %p23, 0, %s22
    %s25 = sadd.s32 1, %s16
    %s26 = scalar_select %p23, %s25, %s16
    %p27 = scmp.ge.s32.totalorder %s26, 1
    %s28 = scalar_select %p27, 0, %s26
    %s29 = ssub.s32 %s17, %s24
    %p30 = scmp.eq.s32.totalorder %s29, 0
    %s32 = sadd.s32 %s31, 1
    %s33 = scalar_select %p30, %s31, %s32
    %p36 = pneg %p30
    %p37 = scmp.eq.s32.totalorder %s9, 1
    %p38 = por %p36, %p37
    %p39 = scmp.ne.s32.totalorder %s31, %s34
    %p40 = scmp.eq.s32.totalorder %s9, 0
    %p41 = por %p39, %p40
    %p42 = scmp.ne.s32.totalorder %s31, %s34
    %p43 = scmp.eq.s32.totalorder %s14, 1
    %p44 = por %p42, %p43
    %p45 = scmp.ne.s32.totalorder %s34, %s35
    %p46 = scmp.eq.s32.totalorder %s14, 0
    %p47 = por %p45, %p46
    %p48 = scmp.ne.s32.totalorder %s34, %s35
    %p49 = scmp.eq.s32.totalorder %s15, 1
    %p50 = por %p48, %p49
    %p52 = scmp.ne.s32.totalorder %s35, %s51
    %p53 = scmp.eq.s32.totalorder %s15, 0
    %p54 = por %p52, %p53
    %s55 = ssub.s32 %s16, %s28
    %p56 = scmp.eq.s32.totalorder %s55, 0
    %s58 = sadd.s32 %s57, 1
    %s59 = scalar_select %p56, %s57, %s58
    %p62 = pneg %p56
    %p63 = scmp.eq.s32.totalorder %s9, 1
    %p64 = por %p62, %p63
    %p65 = scmp.ne.s32.totalorder %s57, %s60
    %p66 = scmp.eq.s32.totalorder %s9, 0
    %p67 = por %p65, %p66
    %p68 = scmp.ne.s32.totalorder %s57, %s60
    %p69 = scmp.eq.s32.totalorder %s14, 1
    %p70 = por %p68, %p69
    %p71 = scmp.ne.s32.totalorder %s60, %s61
    %p72 = scmp.eq.s32.totalorder %s14, 0
    %p73 = por %p71, %p72
    %p74 = scmp.ne.s32.totalorder %s60, %s61
    %p75 = scmp.eq.s32.totalorder %s15, 1
    %p76 = por %p74, %p75
    %p78 = scmp.ne.s32.totalorder %s61, %s77
    %p79 = scmp.eq.s32.totalorder %s15, 0
    %p80 = por %p78, %p79
    %s81 = ssub.s32 %s16, %s28
    %p82 = scmp.eq.s32.totalorder %s81, 0
    %s84 = sadd.s32 %s83, 1
    %s85 = scalar_select %p82, %s83, %s84
    %p88 = pneg %p82
    %p89 = scmp.eq.s32.totalorder %s9, 1
    %p90 = por %p88, %p89
    %p91 = scmp.ne.s32.totalorder %s83, %s86
    %p92 = scmp.eq.s32.totalorder %s9, 0
    %p93 = por %p91, %p92
    %p94 = scmp.ne.s32.totalorder %s83, %s86
    %p95 = scmp.eq.s32.totalorder %s14, 1
    %p96 = por %p94, %p95
    %p97 = scmp.ne.s32.totalorder %s86, %s87
    %p98 = scmp.eq.s32.totalorder %s14, 0
    %p99 = por %p97, %p98
    %p100 = scmp.ne.s32.totalorder %s86, %s87
    %p101 = scmp.eq.s32.totalorder %s15, 1
    %p102 = por %p100, %p101
    %p104 = scmp.ne.s32.totalorder %s87, %s103
    %p105 = scmp.eq.s32.totalorder %s15, 0
    %p106 = por %p104, %p105
    %s107 = ssub.s32 %s17, %s24
    %s108 = ssub.s32 %s16, %s28
    %s109 = sor.u32 %s107, %s108
    %p110 = scmp.eq.s32.totalorder %s109, 0
    %s112 = sadd.s32 %s111, 1
    %s113 = scalar_select %p110, %s111, %s112
    %p116 = pneg %p110
    %p117 = scmp.eq.s32.totalorder %s9, 1
    %p118 = por %p116, %p117
    %p119 = scmp.ne.s32.totalorder %s111, %s114
    %p120 = scmp.eq.s32.totalorder %s9, 0
    %p121 = por %p119, %p120
    %p122 = scmp.ne.s32.totalorder %s111, %s114
    %p123 = scmp.eq.s32.totalorder %s14, 1
    %p124 = por %p122, %p123
    %p125 = scmp.ne.s32.totalorder %s114, %s115
    %p126 = scmp.eq.s32.totalorder %s14, 0
    %p127 = por %p125, %p126
    %p128 = scmp.ne.s32.totalorder %s114, %s115
    %p129 = scmp.eq.s32.totalorder %s15, 1
    %p130 = por %p128, %p129
    %p132 = scmp.ne.s32.totalorder %s115, %s131
    %p133 = scmp.eq.s32.totalorder %s15, 0
    %p134 = por %p132, %p133
    %p135 = scmp.le.s32.totalorder 1, %s9
    %p136 = scmp.lt.s32.totalorder %s9, 3
    %p137 = pnand %p135, %p136
    %p138 = pneg %p137
    // Predicated region
    $region9: #{tpu_custom_call.1} parent=5 // pred_check
      _
    $region10: #{tpu_custom_call.1} parent=5 // pred_check_branch
      %140 = sbr.rel (%p137) target = $region12
    $region11: #{tpu_custom_call.1} parent=5 // pred_region
      %s141 = ssub.s32 %s9, 1
      // Predicated region
      $region13: #{tpu_custom_call.1} parent=11 // pred_check
        %p142 = pneg %p73
      $region14: #{tpu_custom_call.1} parent=11 // pred_check_branch
        %144 = sbr.rel (%p142) target = $region16
      $region15: #{tpu_custom_call.1} parent=11 // pred_region
        %p145 = scmp.lt.s32.totalorder %s18, 0
        %s146 = scalar_select %p145, %s18, 0
        %s147 = smul.addr %s146, 8
        %s148 = scalar_lea.vmem %s1, %s147
      $region16: #{tpu_custom_call.1} parent=11 // pred_fallthru
        _
      // Predicated region
      $region17: #{tpu_custom_call.1} parent=11 // pred_check
        %p149 = pneg %p99
      $region18: #{tpu_custom_call.1} parent=11 // pred_check_branch
        %151 = sbr.rel (%p149) target = $region20
      $region19: #{tpu_custom_call.1} parent=11 // pred_region
        %p152 = scmp.lt.s32.totalorder %s18, 0
        %s153 = scalar_select %p152, %s18, 0
        %s154 = scalar_lea.vmem %s2, %s153
      $region20: #{tpu_custom_call.1} parent=11 // pred_fallthru
        _
    $region12: #{tpu_custom_call.1} parent=5 // pred_fallthru
      _
    %p155 = scmp.lt.s32.totalorder %s9, 2
    // Predicated region
    $region21: #{tpu_custom_call.1} parent=5 // pred_check
      %p156 = pneg %p155
    $region22: #{tpu_custom_call.1} parent=5 // pred_check_branch
      %158 = sbr.rel (%p156) target = $region24
    $region23: #{tpu_custom_call.1} parent=5 // pred_region
      // Predicated region
      $region25: #{tpu_custom_call.1} parent=23 // pred_check
        %p159 = pneg %p41
      $region26: #{tpu_custom_call.1} parent=23 // pred_check_branch
        %161 = sbr.rel (%p159) target = $region28
      $region27: #{tpu_custom_call.1} parent=23 // pred_region
        %p162 = scmp.lt.s32.totalorder %s17, 1
        %s163 = scalar_select %p162, %s17, 1
        %s164 = smul.addr %s163, 8
        %s165 = scalar_lea.vmem %s0, %s164
      $region28: #{tpu_custom_call.1} parent=23 // pred_fallthru
        _
    $region24: #{tpu_custom_call.1} parent=5 // pred_fallthru
      _
    %p166 = scmp.le.s32.totalorder 1, %s9
    %p167 = scmp.lt.s32.totalorder %s9, 3
    %p168 = pnand %p166, %p167
    %p169 = pneg %p168
    // Predicated region
    $region29: #{tpu_custom_call.1} parent=5 // pred_check
      _
    $region30: #{tpu_custom_call.1} parent=5 // pred_check_branch
      %171 = sbr.rel (%p168) target = $region32
    $region31: #{tpu_custom_call.1} parent=5 // pred_region
      %s172 = ssub.s32 %s9, 1
      %p173 = scmp.lt.s32.totalorder %s19, 1
      %s174 = scalar_select %p173, %s19, 1
      %s175 = smul.addr %s174, 8
      %s176 = scalar_lea.vmem %s0, %s175
      %p177 = pneg %p47
      %p178 = pneg %p44
      %p179 = scmp.lt.s32.totalorder %s18, 0
      %s180 = scalar_select %p179, %s18, 0
      %s181 = smul.addr %s180, 8
      %s182 = scalar_lea.vmem %s1, %s181
      %p183 = pneg %p73
      %p184 = pneg %p70
      %p185 = scmp.lt.s32.totalorder %s18, 0
      %s186 = scalar_select %p185, %s18, 0
      %s187 = scalar_lea.vmem %s2, %s186
      %p188 = pneg %p99
      %p189 = pneg %p96
      %p190 = pneg %p127
      %p191 = pneg %p124
      %p192 = scmp.lt.s32.totalorder %s19, 1
      %s193 = scalar_select %p192, %s19, 1
      %p194 = scmp.lt.s32.totalorder %s18, 0
      %s195 = scalar_select %p194, %s18, 0
      %s196 = sadd.s32 %s195, %s193
      %s197 = smul.addr %s196, 8
      %s198 = scalar_lea.vmem %s3, %s197
      %p199 = scmp.lt.s32.totalorder %s19, 1
      %s200 = scalar_select %p199, %s19, 1
      %s201 = smul.addr %s200, 8
      %s202 = scalar_lea.vmem %s0, %s201
      %p203 = scmp.lt.s32.totalorder %s18, 0
      %s204 = scalar_select %p203, %s18, 0
      %s205 = smul.addr %s204, 8
      %s206 = scalar_lea.vmem %s1, %s205
      %p207 = scmp.lt.s32.totalorder %s18, 0
      %s208 = scalar_select %p207, %s18, 0
      %s209 = scalar_lea.vmem %s2, %s208
      %p210 = scmp.lt.s32.totalorder %s19, 1
      %s211 = scalar_select %p210, %s19, 1
      %p212 = scmp.lt.s32.totalorder %s18, 0
      %s213 = scalar_select %p212, %s18, 0
      %s214 = sadd.s32 %s213, %s211
      %s215 = smul.addr %s214, 8
      %s216 = scalar_lea.vmem %s3, %s215
      %v217 = vld [vmem:[%s202] sm:$0xff]
      %v218 = vld [vmem:[%s206] sm:$0xff]
      %v219 = vld [vmem:[%s206 + $0x8] sm:$0xff]
      %v220 = vld [vmem:[%s206 + $0x10] sm:$0xff]
      %v221 = vld [vmem:[%s206 + $0x18] sm:$0xff]
      %v222 = vld [vmem:[%s209] sm:$0x1]
      %v224 = vlaneseq
      %v225 = vshrl.u32 %v224, 7
      %v226 = vsub.s32 0, %v225
      %v227 = vrot.slane %v222, %v226
      %vm229 = vcmask 261120
      %v231 = vsel %vm229, %v217, 0
      %233 = vmatprep.subr.mxu0 0.0
      %234 = vmatpush1.msra.mxu0 %v218
      %235 = vmatprep.subr.mxu0 0.0
      %236 = vmatpush1.msra.mxu0 %v219
      %237 = vmatprep.subr.mxu0 0.0
      %238 = vmatpush1.msra.mxu0 %v220
      %239 = vmatprep.subr.mxu0 0.0
      %240 = vmatpush1.msra.mxu0 %v221
      %241 = vmatprep.subr.mxu0 0.0
      %242 = vmatpush1.msra.mxu0 0.0
      %243 = vmatprep.subr.mxu0 0.0
      %244 = vmatpush1.msra.mxu0 0.0
      %245 = vmatprep.subr.mxu0 0.0
      %246 = vmatpush1.msra.mxu0 0.0
      %247 = vmatprep.subr.mxu0 0.0
      %248 = vmatpush1.msra.mxu0 0.0
      %249 = vmatprep.subr.mxu0 0.0
      %250 = vmatpush1.msra.mxu0 0.0
      %251 = vmatprep.subr.mxu0 0.0
      %252 = vmatpush1.msra.mxu0 0.0
      %253 = vmatprep.subr.mxu0 0.0
      %254 = vmatpush1.msra.mxu0 0.0
      %255 = vmatprep.subr.mxu0 0.0
      %256 = vmatpush1.msra.mxu0 0.0
      %257 = vmatprep.subr.mxu0 0.0
      %258 = vmatpush1.msra.mxu0 0.0
      %259 = vmatprep.subr.mxu0 0.0
      %260 = vmatpush1.msra.mxu0 0.0
      %261 = vmatprep.subr.mxu0 0.0
      %262 = vmatpush1.msra.mxu0 0.0
      %263 = vmatprep.subr.mxu0 0.0
      %264 = vmatpush1.msra.mxu0 0.0
      %265 = vmatprep.subr.mxu0 0.0
      %266 = vmatpush1.msra.mxu0 0.0
      %267 = vmatprep.subr.mxu0 0.0
      %268 = vmatpush1.msra.mxu0 0.0
      %269 = vmatprep.subr.mxu0 0.0
      %270 = vmatpush1.msra.mxu0 0.0
      %271 = vmatprep.subr.mxu0 0.0
      %272 = vmatpush1.msra.mxu0 0.0
      %273 = vmatprep.subr.mxu0 0.0
      %274 = vmatpush1.msra.mxu0 0.0
      %275 = vmatprep.subr.mxu0 0.0
      %276 = vmatpush1.msra.mxu0 0.0
      %277 = vmatprep.subr.mxu0 0.0
      %278 = vmatpush1.msra.mxu0 0.0
      %279 = vmatprep.subr.mxu0 0.0
      %280 = vmatpush1.msra.mxu0 0.0
      %281 = vmatprep.subr.mxu0 0.0
      %282 = vmatpush1.msra.mxu0 0.0
      %283 = vmatprep.subr.mxu0 0.0
      %284 = vmatpush1.msra.mxu0 0.0
      %285 = vmatprep.subr.mxu0 0.0
      %286 = vmatpush1.msra.mxu0 0.0
      %287 = vmatprep.subr.mxu0 0.0
      %288 = vmatpush1.msra.mxu0 0.0
      %289 = vmatprep.subr.mxu0 0.0
      %290 = vmatpush1.msra.mxu0 0.0
      %291 = vmatprep.subr.mxu0 0.0
      %292 = vmatpush1.msra.mxu0 0.0
      %293 = vmatprep.subr.mxu0 0.0
      %294 = vmatpush1.msra.mxu0 0.0
      %295 = vmatprep.subr.mxu0 0.0
      %296 = vmatpush1.msra.mxu0 0.0
      %297 = vmatprep.mubr.f32.mxu0 0.0
      %298 = vmatmul.mubr.f32.gmra.mrb[0].mxu0 %v231
      %v299 = vpop.f32.mrb[0].mxu0
      %v300 = vadd.f32 %v227, %v299
      %v301 = vpop.f32.mrb[0].mxu0
      %302 = vdwg.mxu0
      %vm303 = vcmask 31744
      %304 = vst.msk [vmem:[%s216] sm:$0xff] %vm303, %v300
      %p305 = scmp.lt.s32.totalorder %s19, 1
      %s306 = scalar_select %p305, %s19, 1
      %p307 = scmp.lt.s32.totalorder %s18, 0
      %s308 = scalar_select %p307, %s18, 0
      %s309 = sadd.s32 %s308, %s306
      %s310 = smul.addr %s309, 8
      %s311 = scalar_lea.vmem %s3, %s310
      // Predicated region
      $region33: #{tpu_custom_call.1} parent=31 // pred_check
        %p312 = pneg %p124
      $region34: #{tpu_custom_call.1} parent=31 // pred_check_branch
        %314 = sbr.rel (%p312) target = $region36
      $region35: #{tpu_custom_call.1} parent=31 // pred_region
        _
      $region36: #{tpu_custom_call.1} parent=31 // pred_fallthru
        _
    $region32: #{tpu_custom_call.1} parent=5 // pred_fallthru
      _
    %p315 = scmp.le.s32.totalorder 2, %s9
    // Predicated region
    $region37: #{tpu_custom_call.1} parent=5 // pred_check
      %p316 = pneg %p315
    $region38: #{tpu_custom_call.1} parent=5 // pred_check_branch
      %318 = sbr.rel (%p316) target = $region40
    $region39: #{tpu_custom_call.1} parent=5 // pred_region
      %s319 = ssub.s32 %s9, 2
      // Predicated region
      $region41: #{tpu_custom_call.1} parent=39 // pred_check
        %p320 = pneg %p130
      $region42: #{tpu_custom_call.1} parent=39 // pred_check_branch
        %322 = sbr.rel (%p320) target = $region44
      $region43: #{tpu_custom_call.1} parent=39 // pred_region
        %p323 = scmp.lt.s32.totalorder %s21, 1
        %s324 = scalar_select %p323, %s21, 1
        %p325 = scmp.lt.s32.totalorder %s20, 0
        %s326 = scalar_select %p325, %s20, 0
        %s327 = sadd.s32 %s326, %s324
        %s328 = smul.addr %s327, 8
        %s329 = scalar_lea.vmem %s3, %s328
      $region44: #{tpu_custom_call.1} parent=39 // pred_fallthru
        _
    $region40: #{tpu_custom_call.1} parent=5 // pred_fallthru
      _
  $region6: #{tpu_custom_call.1} parent=0 // loop_footer
    %s13 = sadd.s32 1, %s9
  $region7: #{tpu_custom_call.1} parent=0 // loop_footer_branch
    %8 = sbr.rel target = $region3
  $region8: #{tpu_custom_call.1} parent=0 // loop_exit
    _

</llo_original>
